<compile_context>
chip_gen: v7x
topology: tpu7x:2x2x1
jax: 0.10.0
libtpu: 0.0.40
codegen_flags: <defaults>
</compile_context>

<pallas_src>
import functools

import jax
import jax.numpy as jnp
from jax.experimental import pallas as pl
from jax.experimental.pallas import tpu as pltpu


def _layernorm_kernel(x_ref, gamma_ref, beta_ref, o_ref, *, eps, use_mxu_reduce):
    # x block: (TILE_ROWS, D); gamma/beta block: (1, D).
    x_raw = x_ref[...]                       # native dtype (e.g. bf16)
    x = x_raw.astype(jnp.float32)
    d = x.shape[-1]

    if use_mxu_reduce:
        # Offload the cross-lane reduce to the otherwise idle MXU: dot with a
        # ones matrix gives the per-row sum replicated over 128 lanes; keep
        # lane 0.  bf16 x bf16 products with f32 accumulation are exact for
        # the inputs, so nothing is lost vs an f32 XLU sum.
        ones_mat = jnp.ones((d, 128), dtype=x_raw.dtype)
        s = jnp.dot(x_raw, ones_mat, preferred_element_type=jnp.float32)[:, :1]
    else:
        s = jnp.sum(x, axis=-1, keepdims=True)
    mean = s * jnp.float32(1.0 / d)

    # Two-pass (centered) variance; `centered` is reused for the output.
    centered = x - mean
    sq = centered * centered
    if use_mxu_reduce:
        # Casting the squares back to the narrow dtype costs < the output's own
        # quantization error, so it is invisible for bf16 outputs.
        ss = jnp.dot(sq.astype(x_raw.dtype), ones_mat,
                     preferred_element_type=jnp.float32)[:, :1]
    else:
        ss = jnp.sum(sq, axis=-1, keepdims=True)

    # torch.std() default is unbiased (ddof=1); guard d == 1 against /0.
    var = ss * jnp.float32(1.0 / max(d - 1, 1))
    std = jnp.sqrt(var)

    # One reciprocal per row instead of D divides per row.
    inv = pl.reciprocal(std + jnp.float32(eps), approx=False)

    gamma = gamma_ref[...].astype(jnp.float32)
    beta = beta_ref[...].astype(jnp.float32)
    o_ref[...] = (centered * inv * gamma + beta).astype(o_ref.dtype)


def _round_up(n, m):
    return ((n + m - 1) // m) * m


def pallas_layernorm_2d(x2d, gamma, beta, *, eps=1e-6, tile_rows=None,
                        target_tile_bytes=2 * 1024 * 1024,
                        use_mxu_reduce=None, donate_x=False):
    """LayerNorm over the last dim of a [R, D] slab (no padding, no slicing)."""
    R, D = x2d.shape
    itemsize = jnp.dtype(x2d.dtype).itemsize
    # Sublane packing multiple: f32 -> 8, bf16/f16 -> 16, int8/fp8 -> 32.
    sublane = {4: 8, 2: 16, 1: 32}.get(itemsize, 8)
    if use_mxu_reduce is None:
        # MXU offload only where it helps (v7x bf16) and is numerically safe.
        use_mxu_reduce = itemsize == 2

    if tile_rows is None:
        # Size blocks to ~target_tile_bytes of the *actual* dtype (mem-bound
        # kernel: big tiles amortize the ~0.35us per-grid-step overhead).
        tr = max(1, target_tile_bytes // (D * itemsize))
        tr = max(sublane, min(2048, (tr // sublane) * sublane))
        # Keep >= ~8 grid steps so double-buffering has work to overlap and
        # v7x's two TensorCores both get a share of the "parallel" grid axis.
        tr = min(tr, max(sublane, _round_up(pl.cdiv(R, 8), sublane)))
        tile_rows = tr
    tile_rows = max(sublane, (tile_rows // sublane) * sublane)

    grid = (pl.cdiv(R, tile_rows),)  # last block may be partial (masked stores)

    gamma2d = gamma.reshape(1, D)
    beta2d = beta.reshape(1, D)

    extra_kwargs = {}
    if donate_x:
        # Output shape/dtype matches the input exactly; reuse its HBM buffer.
        extra_kwargs["input_output_aliases"] = {0: 0}

    return pl.pallas_call(
        functools.partial(_layernorm_kernel, eps=eps,
                          use_mxu_reduce=use_mxu_reduce),
        out_shape=jax.ShapeDtypeStruct((R, D), x2d.dtype),
        grid_spec=pltpu.PrefetchScalarGridSpec(
            num_scalar_prefetch=0,
            grid=grid,
            in_specs=[
                pl.BlockSpec((tile_rows, D), lambda i: (i, 0)),
                pl.BlockSpec((1, D), lambda i: (0, 0)),  # resident gamma
                pl.BlockSpec((1, D), lambda i: (0, 0)),  # resident beta
            ],
            out_specs=pl.BlockSpec((tile_rows, D), lambda i: (i, 0)),
        ),
        compiler_params=pltpu.CompilerParams(
            dimension_semantics=("parallel",),
            # 32 MiB scoped VMEM: above the v5e 16 MiB default, and safely
            # below v7x's 64 MiB physical (f32 temporaries inflate the
            # per-step working set well beyond the raw in/out blocks).
            vmem_limit_bytes=32 * 1024 * 1024,
        ),
        **extra_kwargs,
    )(x2d, gamma2d, beta2d)


def layernorm_forward(x, gamma, beta, eps=1e-6):
    """Mirrors LayerNorm.forward: normalize the last dim of x (any leading dims)."""
    D = x.shape[-1]
    lead = x.shape[:-1]
    R = 1
    for s in lead:
        R *= s
    # TODO(synk): for d_model < 128 the output stores are lane-masked (only a
    # fraction of each vreg used); a lane-repacking path was not implemented
    # since real d_model is >= 128.
    y = pallas_layernorm_2d(x.reshape(R, D), gamma, beta, eps=eps)
    return y.reshape(*lead, D)


def _reference(x, gamma, beta, eps=1e-6):
    x = x.astype(jnp.float32)
    D = x.shape[-1]
    mean = jnp.mean(x, axis=-1, keepdims=True)
    std = jnp.sqrt(jnp.sum((x - mean) ** 2, axis=-1, keepdims=True) / (D - 1))
    return gamma * (x - mean) / (std + eps) + beta


if __name__ == "__main__":
    key = jax.random.PRNGKey(0)
    k1, k2, k3, k4, k5 = jax.random.split(key, 5)

    # Case 1: parameters as in __init__ (gamma=ones, beta=zeros), lane-dense D.
    B, S, D = 2, 8, 128
    x = jax.random.normal(k1, (B, S, D), dtype=jnp.float32)
    gamma = jnp.ones((D,), dtype=jnp.float32)
    beta = jnp.zeros((D,), dtype=jnp.float32)

    out = layernorm_forward(x, gamma, beta)
    jax.block_until_ready(out)
    ref = _reference(x, gamma, beta)
    assert jnp.allclose(out, ref, atol=1e-5, rtol=1e-5), "mismatch vs reference (case 1)"

    # Case 2: ragged row count (exercises the partial-last-block path,
    # no pad / no slice) + non-trivial affine params.
    x2 = jax.random.normal(k2, (3, 5, D), dtype=jnp.float32)
    gamma2 = 1.0 + 0.1 * jax.random.normal(k3, (D,), dtype=jnp.float32)
    beta2 = 0.1 * jax.random.normal(k4, (D,), dtype=jnp.float32)

    out2 = layernorm_forward(x2, gamma2, beta2)
    jax.block_until_ready(out2)
    ref2 = _reference(x2, gamma2, beta2)
    assert jnp.allclose(out2, ref2, atol=1e-5, rtol=1e-5), "mismatch vs reference (case 2)"

    # Case 3: bf16 input (dtype-aware tiling: sublane multiple 16, MXU-offloaded
    # cross-lane reductions).  Tolerance is set by bf16 output quantization.
    x3 = jax.random.normal(k5, (4, 16, D), dtype=jnp.float32).astype(jnp.bfloat16)
    out3 = layernorm_forward(x3, gamma2, beta2)
    jax.block_until_ready(out3)
    ref3 = _reference(x3, gamma2, beta2)
    assert jnp.allclose(out3.astype(jnp.float32), ref3, atol=2e-2, rtol=2e-2), \
        "mismatch vs reference (case 3, bf16)"

    print("KERNEL_OK")
</pallas_src>

<mosaic_0001>
module attributes {stable_mosaic.version = 11 : i64} {
  func.func @_layernorm_kernel(%arg0: i32, %arg1: memref<8x128xf32, #tpu.memory_space<vmem>>, %arg2: memref<1x128xf32, #tpu.memory_space<vmem>>, %arg3: memref<1x128xf32, #tpu.memory_space<vmem>>, %arg4: memref<8x128xf32, #tpu.memory_space<vmem>>) attributes {dimension_semantics = [#tpu.dimension_semantics<parallel>], iteration_bounds = array<i64: 2>, scalar_prefetch = 0 : i64, scratch_operands = 0 : i64, tpu.core_type = #tpu.core_type<tc>, window_params = [{transform_indices = @transform_0, window_bounds = array<i64: 8, 128>}, {pipeline_mode = #tpu.pipeline_mode<synchronous>, transform_indices = @transform_1, window_bounds = array<i64: 1, 128>}, {pipeline_mode = #tpu.pipeline_mode<synchronous>, transform_indices = @transform_2, window_bounds = array<i64: 1, 128>}, {transform_indices = @transform_3, window_bounds = array<i64: 8, 128>}]} {
    %c0 = arith.constant 0 : index
    %c0_0 = arith.constant 0 : index
    %0 = vector.load %arg1[%c0, %c0_0] : memref<8x128xf32, #tpu.memory_space<vmem>>, vector<8x128xf32>
    %cst = arith.constant dense<0.000000e+00> : vector<8xf32>
    %1 = vector.multi_reduction <add>, %0, %cst [1] : vector<8x128xf32> to vector<8xf32>
    %2 = vector.shape_cast %1 : vector<8xf32> to vector<8x1xf32>
    %cst_1 = arith.constant 7.812500e-03 : f32
    %3 = vector.broadcast %cst_1 : f32 to vector<8x1xf32>
    %4 = arith.mulf %2, %3 : vector<8x1xf32>
    %5 = vector.broadcast %4 : vector<8x1xf32> to vector<8x128xf32>
    %6 = arith.subf %0, %5 : vector<8x128xf32>
    %7 = arith.mulf %6, %6 : vector<8x128xf32>
    %cst_2 = arith.constant dense<0.000000e+00> : vector<8xf32>
    %8 = vector.multi_reduction <add>, %7, %cst_2 [1] : vector<8x128xf32> to vector<8xf32>
    %9 = vector.shape_cast %8 : vector<8xf32> to vector<8x1xf32>
    %cst_3 = arith.constant 0.00787401571 : f32
    %10 = vector.broadcast %cst_3 : f32 to vector<8x1xf32>
    %11 = arith.mulf %9, %10 : vector<8x1xf32>
    %12 = math.sqrt %11 : vector<8x1xf32>
    %cst_4 = arith.constant 9.99999997E-7 : f32
    %13 = vector.broadcast %cst_4 : f32 to vector<8x1xf32>
    %14 = arith.addf %12, %13 : vector<8x1xf32>
    %15 = tpu.reciprocal %14 : vector<8x1xf32> -> vector<8x1xf32>
    %c0_5 = arith.constant 0 : index
    %c0_6 = arith.constant 0 : index
    %16 = vector.load %arg2[%c0_5, %c0_6] : memref<1x128xf32, #tpu.memory_space<vmem>>, vector<1x128xf32>
    %c0_7 = arith.constant 0 : index
    %c0_8 = arith.constant 0 : index
    %17 = vector.load %arg3[%c0_7, %c0_8] : memref<1x128xf32, #tpu.memory_space<vmem>>, vector<1x128xf32>
    %18 = vector.broadcast %15 : vector<8x1xf32> to vector<8x128xf32>
    %19 = arith.mulf %6, %18 : vector<8x128xf32>
    %20 = vector.broadcast %16 : vector<1x128xf32> to vector<8x128xf32>
    %21 = arith.mulf %19, %20 : vector<8x128xf32>
    %22 = vector.broadcast %17 : vector<1x128xf32> to vector<8x128xf32>
    %23 = arith.addf %21, %22 : vector<8x128xf32>
    %c0_9 = arith.constant 0 : index
    %c0_10 = arith.constant 0 : index
    %24 = vector.load %arg4[%c0_9, %c0_10] : memref<8x128xf32, #tpu.memory_space<vmem>>, vector<8x128xf32>
    tpu.vector_store %arg4[%c0_9, %c0_10], %23 {strides = array<i32>} : memref<8x128xf32, #tpu.memory_space<vmem>>, vector<8x128xf32>,
    return
  }
  func.func @transform_0(%arg0: i32) -> (i32, i32) {
    %c0_i32 = arith.constant 0 : i32
    %c0_i32_0 = arith.constant 0 : i32
    return %arg0, %c0_i32 : i32, i32
  }
  func.func @transform_1(%arg0: i32) -> (i32, i32) {
    %c0_i32 = arith.constant 0 : i32
    %c0_i32_0 = arith.constant 0 : i32
    %c0_i32_1 = arith.constant 0 : i32
    return %c0_i32, %c0_i32_0 : i32, i32
  }
  func.func @transform_2(%arg0: i32) -> (i32, i32) {
    %c0_i32 = arith.constant 0 : i32
    %c0_i32_0 = arith.constant 0 : i32
    %c0_i32_1 = arith.constant 0 : i32
    return %c0_i32, %c0_i32_0 : i32, i32
  }
  func.func @transform_3(%arg0: i32) -> (i32, i32) {
    %c0_i32 = arith.constant 0 : i32
    %c0_i32_0 = arith.constant 0 : i32
    return %arg0, %c0_i32 : i32, i32
  }
}

</mosaic_0001>

<llo_original>
// kernel: tpu_custom_call.1
$region0: #{tpu_custom_call.1}
  #allocation0 [shape = 'u32[]', space=smem, size = 0x4, offset = 0x4, fixed_abs, tag = 'smem constant byte address 0x4 - core index']
  #allocation1 [shape = 'u32[144,128]{1,0:T(1,128)}', space=vmem, size = 0x12000, scoped, tag = 'internal scratch']
  %s0 = inlined_call_operand.hbm [shape: f32[16,128], index: 0, kind: input, shape index: {}]
  %s1 = inlined_call_operand.vmem [shape: f32[1,128], index: 1, kind: input, shape index: {}]
  %s2 = inlined_call_operand.vmem [shape: f32[1,128], index: 2, kind: input, shape index: {}]
  %s3 = inlined_call_operand.hbm [shape: f32[16,128], index: 3, kind: output, shape index: {}]
  %s4 = sld [smem:[#allocation0]]
  $region49: #{tpu_custom_call.1} parent=0
    _
  %s6 = ssub.s32 1, %s4
  %s7 = scalar_select 0, %s6, %s4
  $region1: #{tpu_custom_call.1} parent=0
    #allocation2 [shape = 'u8[8192]{0}', space=vmem, size = 0x2000, scoped, tag = 'input window, operand 0']
    #allocation3 [shape = 's32[2]{0}', space=sflag, size = 0x8, scoped, tag = 'scoped memory for tpu_custom_call.1']
    #allocation4 [shape = 's32[2]{0}', space=sflag, size = 0x8, scoped, tag = 'scoped memory for tpu_custom_call.1']
    #allocation5 [shape = 'u8[8192]{0}', space=vmem, size = 0x2000, scoped, tag = 'output window, operand 0']
    %8 = vsyncpa [#allocation3], 0
    %s9 = scalar_lea.sflag [#allocation3], 1
    %10 = vsyncpa %s9, 0
    %11 = vsyncpa [#allocation4], 0
    %s12 = scalar_lea.sflag [#allocation4], 1
    %13 = vsyncpa %s12, 0
    loop: start=0, step=1, limit=4
    $region2: #{tpu_custom_call.1} parent=1 // loop_pre_header
      _
    $region3: #{tpu_custom_call.1} parent=1 // loop_header
      %s15 = sphi 0, %s19
      %p16 = scmp.ge.s32.totalorder %s15, 4
      %s25 = sphi 0, %s27
      %s28 = sphi 0, %s25
      %s29 = sphi 0, %s28
      %s45 = sphi 0, %s29
      %s49 = sphi 0, %s49
      %s51 = sphi 0, %s49
      %s52 = sphi 0, %s51
      %s66 = sphi 0, %s52
      %s70 = sphi 0, %s70
      %s72 = sphi 0, %s70
      %s73 = sphi 0, %s72
      %s87 = sphi 0, %s73
      %s93 = sphi 0, %s95
      %s96 = sphi 0, %s93
      %s97 = sphi 0, %s96
      %s113 = sphi 0, %s97
    $region4: #{tpu_custom_call.1} parent=1 // loop_header_branch
      %18 = sbr.rel (%p16) target = $region8
    $region5: #{tpu_custom_call.1} parent=1 // loop_body
      %s20 = ssub.s32 %s15, 1
      %s21 = ssub.s32 %s15, 2
      %s22 = sadd.s32 %s15, 1
      %s23 = ssub.s32 %s15, %s22
      %p24 = scmp.eq.s32.totalorder %s23, 0
      %s26 = sadd.s32 %s25, 1
      %s27 = scalar_select %p24, %s25, %s26
      %p30 = pneg %p24
      %p31 = scmp.eq.s32.totalorder %s15, 1
      %p32 = por %p30, %p31
      %p33 = scmp.ne.s32.totalorder %s25, %s28
      %p34 = scmp.eq.s32.totalorder %s15, 0
      %p35 = por %p33, %p34
      %p36 = scmp.ne.s32.totalorder %s25, %s28
      %p37 = scmp.eq.s32.totalorder %s20, 1
      %p38 = por %p36, %p37
      %p39 = scmp.ne.s32.totalorder %s28, %s29
      %p40 = scmp.eq.s32.totalorder %s20, 0
      %p41 = por %p39, %p40
      %p42 = scmp.ne.s32.totalorder %s28, %s29
      %p43 = scmp.eq.s32.totalorder %s21, 1
      %p44 = por %p42, %p43
      %p46 = scmp.ne.s32.totalorder %s29, %s45
      %p47 = scmp.eq.s32.totalorder %s21, 0
      %p48 = por %p46, %p47
      %s50 = sadd.s32 %s49, 1
      %p53 = scmp.eq.s32.totalorder %s15, 1
      %p54 = scmp.ne.s32.totalorder %s49, %s51
      %p55 = scmp.eq.s32.totalorder %s15, 0
      %p56 = por %p54, %p55
      %p57 = scmp.ne.s32.totalorder %s49, %s51
      %p58 = scmp.eq.s32.totalorder %s20, 1
      %p59 = por %p57, %p58
      %p60 = scmp.ne.s32.totalorder %s51, %s52
      %p61 = scmp.eq.s32.totalorder %s20, 0
      %p62 = por %p60, %p61
      %p63 = scmp.ne.s32.totalorder %s51, %s52
      %p64 = scmp.eq.s32.totalorder %s21, 1
      %p65 = por %p63, %p64
      %p67 = scmp.ne.s32.totalorder %s52, %s66
      %p68 = scmp.eq.s32.totalorder %s21, 0
      %p69 = por %p67, %p68
      %s71 = sadd.s32 %s70, 1
      %p74 = scmp.eq.s32.totalorder %s15, 1
      %p75 = scmp.ne.s32.totalorder %s70, %s72
      %p76 = scmp.eq.s32.totalorder %s15, 0
      %p77 = por %p75, %p76
      %p78 = scmp.ne.s32.totalorder %s70, %s72
      %p79 = scmp.eq.s32.totalorder %s20, 1
      %p80 = por %p78, %p79
      %p81 = scmp.ne.s32.totalorder %s72, %s73
      %p82 = scmp.eq.s32.totalorder %s20, 0
      %p83 = por %p81, %p82
      %p84 = scmp.ne.s32.totalorder %s72, %s73
      %p85 = scmp.eq.s32.totalorder %s21, 1
      %p86 = por %p84, %p85
      %p88 = scmp.ne.s32.totalorder %s73, %s87
      %p89 = scmp.eq.s32.totalorder %s21, 0
      %p90 = por %p88, %p89
      %s91 = ssub.s32 %s15, %s22
      %p92 = scmp.eq.s32.totalorder %s91, 0
      %s94 = sadd.s32 %s93, 1
      %s95 = scalar_select %p92, %s93, %s94
      %p98 = pneg %p92
      %p99 = scmp.eq.s32.totalorder %s15, 1
      %p100 = por %p98, %p99
      %p101 = scmp.ne.s32.totalorder %s93, %s96
      %p102 = scmp.eq.s32.totalorder %s15, 0
      %p103 = por %p101, %p102
      %p104 = scmp.ne.s32.totalorder %s93, %s96
      %p105 = scmp.eq.s32.totalorder %s20, 1
      %p106 = por %p104, %p105
      %p107 = scmp.ne.s32.totalorder %s96, %s97
      %p108 = scmp.eq.s32.totalorder %s20, 0
      %p109 = por %p107, %p108
      %p110 = scmp.ne.s32.totalorder %s96, %s97
      %p111 = scmp.eq.s32.totalorder %s21, 1
      %p112 = por %p110, %p111
      %p114 = scmp.ne.s32.totalorder %s97, %s113
      %p115 = scmp.eq.s32.totalorder %s21, 0
      %p116 = por %p114, %p115
      %p117 = scmp.le.s32.totalorder 1, %s15
      %p118 = scmp.lt.s32.totalorder %s15, 3
      %p119 = pnand %p117, %p118
      %p120 = pneg %p119
      // Predicated region
      $region9: #{tpu_custom_call.1} parent=5 // pred_check
        _
      $region10: #{tpu_custom_call.1} parent=5 // pred_check_branch
        %122 = sbr.rel (%p119) target = $region12
      $region11: #{tpu_custom_call.1} parent=5 // pred_region
        %s123 = ssub.s32 %s15, 1
        // Predicated region
        $region13: #{tpu_custom_call.1} parent=11 // pred_check
          %p124 = pneg %p62
        $region14: #{tpu_custom_call.1} parent=11 // pred_check_branch
          %126 = sbr.rel (%p124) target = $region16
        $region15: #{tpu_custom_call.1} parent=11 // pred_region
          _
        $region16: #{tpu_custom_call.1} parent=11 // pred_fallthru
          _
        // Predicated region
        $region17: #{tpu_custom_call.1} parent=11 // pred_check
          %p127 = pneg %p83
        $region18: #{tpu_custom_call.1} parent=11 // pred_check_branch
          %129 = sbr.rel (%p127) target = $region20
        $region19: #{tpu_custom_call.1} parent=11 // pred_region
          _
        $region20: #{tpu_custom_call.1} parent=11 // pred_fallthru
          _
      $region12: #{tpu_custom_call.1} parent=5 // pred_fallthru
        _
      %p130 = scmp.lt.s32.totalorder %s15, 2
      // Predicated region
      $region21: #{tpu_custom_call.1} parent=5 // pred_check
        %p131 = pneg %p130
      $region22: #{tpu_custom_call.1} parent=5 // pred_check_branch
        %133 = sbr.rel (%p131) target = $region24
      $region23: #{tpu_custom_call.1} parent=5 // pred_region
        // Predicated region
        $region25: #{tpu_custom_call.1} parent=23 // pred_check
          %p134 = pneg %p35
        $region26: #{tpu_custom_call.1} parent=23 // pred_check_branch
          %136 = sbr.rel (%p134) target = $region28
        $region27: #{tpu_custom_call.1} parent=23 // pred_region
          %s137 = sand.u32 %s25, 1
          %s138 = scalar_lea.sflag [#allocation3], %s137
          %s139 = sand.u32 %s25, 1
          %s140 = smul.addr %s139, 8
          %s141 = scalar_lea.vmem [#allocation2], %s140
          %s143 = ssub.s32 128, 128
          %144 = vsyncadd %s138, %s143
          %s145 = smul.addr %s15, 128
          %s146 = scalar_lea.hbm %s0, %s145
          %s148 = sshll.u32 %s141, 4
          %s149 = int_to_ptr.vmem [resolvable:$true] %s148
          %151 = dma.hbm_to_vmem [thread:$0]  %s146, 128, %s149, %s138
        $region28: #{tpu_custom_call.1} parent=23 // pred_fallthru
          _
      $region24: #{tpu_custom_call.1} parent=5 // pred_fallthru
        _
      %p152 = scmp.le.s32.totalorder 1, %s15
      %p153 = scmp.lt.s32.totalorder %s15, 3
      %p154 = pnand %p152, %p153
      %p155 = pneg %p154
      // Predicated region
      $region29: #{tpu_custom_call.1} parent=5 // pred_check
        _
      $region30: #{tpu_custom_call.1} parent=5 // pred_check_branch
        %157 = sbr.rel (%p154) target = $region32
      $region31: #{tpu_custom_call.1} parent=5 // pred_region
        %s158 = ssub.s32 %s15, 1
        %s159 = sand.u32 %s28, 1
        %s160 = scalar_lea.sflag [#allocation3], %s159
        %s161 = sand.u32 %s28, 1
        %s162 = smul.addr %s161, 8
        %s163 = scalar_lea.vmem [#allocation2], %s162
        // Predicated region
        $region33: #{tpu_custom_call.1} parent=31 // pred_check
          %p164 = pneg %p41
        $region34: #{tpu_custom_call.1} parent=31 // pred_check_branch
          %166 = sbr.rel (%p164) target = $region36
        $region35: #{tpu_custom_call.1} parent=31 // pred_region
          %167 = dma.done %s160, 128
        $region36: #{tpu_custom_call.1} parent=31 // pred_fallthru
          _
        %s168 = sand.u32 %s28, 1
        %s169 = scalar_lea.sflag [#allocation3], %s168
        %s170 = sand.u32 %s28, 1
        %s171 = smul.addr %s170, 8
        %s172 = scalar_lea.vmem [#allocation2], %s171
        %p173 = pneg %p41
        %p174 = pneg %p38
        %p175 = pneg %p62
        %p176 = pneg %p59
        %p177 = pneg %p83
        %p178 = pneg %p80
        %p179 = pneg %p109
        %p180 = pneg %p106
        %s181 = sand.u32 %s96, 1
        %s182 = scalar_lea.sflag [#allocation4], %s181
        %s183 = sand.u32 %s96, 1
        %s184 = smul.addr %s183, 8
        %s185 = scalar_lea.vmem [#allocation5], %s184
        %v186 = vld [vmem:[%s163] sm:$0xff]
        %187 = vadd.xlane.f32.xlu0 %v186
        %v188 = vpop.xlane.xlu0 %187
        %v189 = vmul.f32 %v188, 0.0078125
        %v190 = vsub.f32 %v186, %v189
        %v191 = vmul.f32 %v190, %v190
        %192 = vadd.xlane.f32.xlu0 %v191
        %v193 = vpop.xlane.xlu0 %192
        %v194 = vmul.f32 %v193, 0.007874016
        %v195 = vrsqrt.pop %v194
        %v196 = vmul.f32 %v194, %v195
        %vm197 = vcmp.eq.f32.partialorder %v194, inf
        %v198 = vsel %vm197, %v194, %v196
        %vm199 = vcmp.eq.f32.partialorder %v194, 0.0
        %v200 = vand.u32 %v194, 2147483648
        %v201 = vsel %vm199, %v200, %v198
        %v202 = vadd.f32 %v201, 1e-06
        %v203 = vrcp.pop %v202
        %v204 = vld [vmem:[%s1] sm:$0x1]
        %v205 = vld [vmem:[%s2] sm:$0x1]
        %v206 = vmul.f32 %v190, %v203
        %v208 = vlaneseq
        %v209 = vshrl.u32 %v208, 7
        %v210 = vsub.s32 0, %v209
        %v211 = vrot.slane %v204, %v210
        %v213 = vmul.f32 %v206, %v211
        %v215 = vlaneseq
        %v216 = vshrl.u32 %v215, 7
        %v217 = vsub.s32 0, %v216
        %v218 = vrot.slane %v205, %v217
        %v220 = vadd.f32 %v213, %v218
        %221 = vst [vmem:[%s185] sm:$0xff] %v220
        %s222 = sand.u32 %s96, 1
        %s223 = scalar_lea.sflag [#allocation4], %s222
        %s224 = sand.u32 %s96, 1
        %s225 = smul.addr %s224, 8
        %s226 = scalar_lea.vmem [#allocation5], %s225
        // Predicated region
        $region37: #{tpu_custom_call.1} parent=31 // pred_check
          %p227 = pneg %p106
        $region38: #{tpu_custom_call.1} parent=31 // pred_check_branch
          %229 = sbr.rel (%p227) target = $region40
        $region39: #{tpu_custom_call.1} parent=31 // pred_region
          %s231 = ssub.s32 128, 128
          %232 = vsyncadd %s223, %s231
          %s233 = smul.addr %s20, 128
          %s234 = scalar_lea.hbm %s3, %s233
          %s236 = sshll.u32 %s226, 4
          %s237 = int_to_ptr.vmem [resolvable:$true] %s236
          %239 = dma.vmem_to_hbm [thread:$0]  %s237, 128, %s234, %s223
        $region40: #{tpu_custom_call.1} parent=31 // pred_fallthru
          _
      $region32: #{tpu_custom_call.1} parent=5 // pred_fallthru
        _
      %p240 = scmp.le.s32.totalorder 2, %s15
      // Predicated region
      $region41: #{tpu_custom_call.1} parent=5 // pred_check
        %p241 = pneg %p240
      $region42: #{tpu_custom_call.1} parent=5 // pred_check_branch
        %243 = sbr.rel (%p241) target = $region44
      $region43: #{tpu_custom_call.1} parent=5 // pred_region
        %s244 = ssub.s32 %s15, 2
        // Predicated region
        $region45: #{tpu_custom_call.1} parent=43 // pred_check
          %p245 = pneg %p112
        $region46: #{tpu_custom_call.1} parent=43 // pred_check_branch
          %247 = sbr.rel (%p245) target = $region48
        $region47: #{tpu_custom_call.1} parent=43 // pred_region
          %s248 = sand.u32 %s97, 1
          %s249 = scalar_lea.sflag [#allocation4], %s248
          %s250 = sand.u32 %s97, 1
          %s251 = smul.addr %s250, 8
          %s252 = scalar_lea.vmem [#allocation5], %s251
          %253 = dma.done %s249, 128
        $region48: #{tpu_custom_call.1} parent=43 // pred_fallthru
          _
      $region44: #{tpu_custom_call.1} parent=5 // pred_fallthru
        _
    $region6: #{tpu_custom_call.1} parent=1 // loop_footer
      %s19 = sadd.s32 1, %s15
    $region7: #{tpu_custom_call.1} parent=1 // loop_footer_branch
      %14 = sbr.rel target = $region3
    $region8: #{tpu_custom_call.1} parent=1 // loop_exit
      _
    %254 = vsyncpa [#allocation3], 1
    %s255 = scalar_lea.sflag [#allocation3], 1
    %256 = vsyncpa %s255, 1
    %257 = vsyncpa [#allocation4], 1
    %s258 = scalar_lea.sflag [#allocation4], 1
    %259 = vsyncpa %s258, 1

</llo_original>
